<compile_context>
chip_gen: v5e
topology: v5e:2x2
jax: 0.10.0
libtpu: 0.0.40
codegen_flags: <defaults>
</compile_context>

<pallas_src>
import functools
import math

import jax
import jax.numpy as jnp
from jax import lax
from jax.experimental import pallas as pl
from jax.experimental.pallas import tpu as pltpu


def _attention_kernel(
    # inputs
    x_ref,       # (1, tq, D)          f32   residual / LayerNorm input
    q_ref,       # (1, 1, Hb, tq, hd)  bf16  pre-projected, pre-scaled queries
    k_ref,       # (1, 1, Hb, S,  hd)  bf16  pre-projected keys
    v_ref,       # (1, 1, Hb, S,  hd)  bf16  pre-projected values
    mask_ref,    # (1, 1, 1, S)        f32   additive attention mask
    wo_ref,      # (1, Hb, hd, D)      bf16  output-projection tile (this group)
    bo_ref,      # (1, D)              f32
    gamma_ref,   # (1, D)              f32
    beta_ref,    # (1, D)              f32
    # outputs
    out_ref,     # (1, tq, D)
    probs_ref,   # (1, Hb, tq, S)
    # scratch
    acc_scr,     # (tq, D) f32 -- output-projection accumulator over head groups
):
    g = pl.program_id(2)
    last_g = pl.num_programs(2) - 1

    q = q_ref[0, 0]        # (Hb, tq, hd) bf16, already scaled by 1/sqrt(hd)
    k = k_ref[0, 0]        # (Hb, S, hd)  bf16
    v = v_ref[0, 0]        # (Hb, S, hd)  bf16
    mask = mask_ref[0]     # (1, 1, S)    f32

    # --- scores = q k^T per head of the group (batched MXU matmul, f32 acc) ---
    scores = lax.dot_general(
        q, k, (((2,), (2,)), ((0,), (0,))),
        preferred_element_type=jnp.float32)             # (Hb, tq, S)
    scores = scores + mask                               # broadcast additive mask

    # --- softmax in f32 (reciprocal routed to the EUP) ------------------------
    m = jnp.max(scores, axis=-1, keepdims=True)
    e = jnp.exp(scores - m)
    # TODO(synk): on v6e/v7x the exp could run on the bf16 EUP path for ~2x rate.
    p = e * pl.reciprocal(jnp.sum(e, axis=-1, keepdims=True), approx=True)

    probs_ref[0] = p.astype(probs_ref.dtype)             # lane-dense (last dim S)

    # --- context per head of the group (batched MXU matmul) -------------------
    ctx = lax.dot_general(
        p.astype(jnp.bfloat16), v, (((2,), (1,)), ((0,), (0,))),
        preferred_element_type=jnp.float32)               # (Hb, tq, hd)

    # --- output-projection partial for this head group ------------------------
    hb = ctx.shape[0]
    part = jnp.dot(ctx[0].astype(jnp.bfloat16), wo_ref[0, 0],
                   preferred_element_type=jnp.float32)    # (tq, D)
    for hh in range(1, hb):
        part = part + jnp.dot(ctx[hh].astype(jnp.bfloat16), wo_ref[0, hh],
                              preferred_element_type=jnp.float32)

    @pl.when(g == 0)
    def _():
        acc_scr[...] = part

    @pl.when(g != 0)
    def _():
        acc_scr[...] += part

    # --- finalize on the last head group: bias + residual + LayerNorm ---------
    @pl.when(g == last_g)
    def _():
        y = acc_scr[...] + bo_ref[...] + x_ref[0]
        u = jnp.mean(y, axis=-1, keepdims=True)
        d = y - u
        var = jnp.mean(d * d, axis=-1, keepdims=True)
        out = gamma_ref[...] * (d * lax.rsqrt(var + 1e-12)) + beta_ref[...]
        out_ref[0] = out.astype(out_ref.dtype)


def _round_up(x, m):
    return -(-x // m) * m


def _padded_block_bytes(shape, dtype):
    """Approximate VMEM bytes of one block after (sublane, lane) tile padding."""
    itemsize = jnp.dtype(dtype).itemsize
    dims = list(shape)
    dims[-1] = _round_up(dims[-1], 128)
    if len(dims) >= 2:
        sub = max(8, 32 // itemsize)
        dims[-2] = _round_up(dims[-2], sub)
    n = 1
    for d in dims:
        n *= d
    return n * itemsize


def attention_forward(hidden_states, attention_mask, params, *, num_heads,
                      q_block=None, head_block=None, probs_dtype=jnp.bfloat16):
    """hidden_states: [B, S, D] f32; attention_mask: [B, 1, 1, S] additive f32."""
    B, S, D = hidden_states.shape
    H = num_heads
    assert D % H == 0, "hidden size must be a multiple of num_heads"
    hd = D // H
    scale = 1.0 / math.sqrt(hd)

    # Query-row tiling: bigger tiles amortize per-step overhead (v5e/v6e).
    if q_block is None:
        if S % 256 == 0:
            q_block = 256
        elif S % 128 == 0:
            q_block = 128
        else:
            q_block = S
    assert S % q_block == 0
    nq = S // q_block

    # Head grouping: largest divisor of H with Hb*hd <= 256 (MXU contraction width).
    if head_block is None:
        head_block = 1
        for c in range(1, H + 1):
            if H % c == 0 and c * hd <= 256:
                head_block = c
    assert H % head_block == 0
    Hb = head_block
    G = H // Hb

    f32, bf16 = jnp.float32, jnp.bfloat16

    # --- Q/K/V projections as full-width XLA matmuls, f32 accumulate, bf16 out.
    # The softmax scale is folded into Q before the cast (cheaper than scaling
    # the (tq, S) scores tensor inside the kernel).
    x2 = hidden_states.reshape(B * S, D).astype(f32)
    q = ((x2 @ params["wq"] + params["bq"]) * scale).astype(bf16)
    k = (x2 @ params["wk"] + params["bk"]).astype(bf16)
    v = (x2 @ params["wv"] + params["bv"]).astype(bf16)

    def split_heads(t):
        # (B*S, D) -> (B, G, Hb, S, hd); head index = g*Hb + h (consecutive).
        return t.reshape(B, S, G, Hb, hd).transpose(0, 2, 3, 1, 4)

    q5, k5, v5 = split_heads(q), split_heads(k), split_heads(v)

    wo4 = params["wo"].astype(bf16).reshape(G, Hb, hd, D)
    bo2 = params["bo"].astype(f32).reshape(1, D)
    gamma2 = params["gamma"].astype(f32).reshape(1, D)
    beta2 = params["beta"].astype(f32).reshape(1, D)
    mask = attention_mask.astype(f32)
    x_res = hidden_states.astype(f32)

    # (block_shape, index_map, dtype) for every operand — dtype used for budgeting.
    in_blocks = [
        ((1, q_block, D),        lambda b, qi, g: (b, qi, 0),        f32),   # residual
        ((1, 1, Hb, q_block, hd), lambda b, qi, g: (b, g, 0, qi, 0), bf16),  # q
        ((1, 1, Hb, S, hd),      lambda b, qi, g: (b, g, 0, 0, 0),   bf16),  # k
        ((1, 1, Hb, S, hd),      lambda b, qi, g: (b, g, 0, 0, 0),   bf16),  # v
        ((1, 1, 1, S),           lambda b, qi, g: (b, 0, 0, 0),      f32),   # mask
        ((1, Hb, hd, D),         lambda b, qi, g: (g, 0, 0, 0),      bf16),  # wo (streamed per group)
        ((1, D),                 lambda b, qi, g: (0, 0),            f32),   # bo
        ((1, D),                 lambda b, qi, g: (0, 0),            f32),   # gamma
        ((1, D),                 lambda b, qi, g: (0, 0),            f32),   # beta
    ]
    out_blocks = [
        ((1, q_block, D),        lambda b, qi, g: (b, qi, 0),        f32),
        ((1, Hb, q_block, S),    lambda b, qi, g: (b, g, qi, 0),     probs_dtype),
    ]

    in_specs = [pl.BlockSpec(s, m) for s, m, _ in in_blocks]
    out_specs = tuple(pl.BlockSpec(s, m) for s, m, _ in out_blocks)
    out_shape = (
        jax.ShapeDtypeStruct((B, S, D), f32),            # attention_output
        jax.ShapeDtypeStruct((B, H, S, S), probs_dtype), # attention_probs
    )
    scratch_shapes = [pltpu.VMEM((q_block, D), f32)]     # head-group accumulator

    # Explicit VMEM budget: double-buffered blocks + scratch + headroom,
    # clamped so it stays inside v7x's 64 MiB while still letting v5e/v6e
    # use their larger VMEM when tiles are big.
    block_bytes = sum(_padded_block_bytes(s, dt) for s, _, dt in in_blocks + out_blocks)
    scratch_bytes = _padded_block_bytes((q_block, D), f32)
    vmem_limit = 2 * block_bytes + scratch_bytes
    vmem_limit = min(max(int(vmem_limit * 1.25) + (4 << 20), 32 << 20), 96 << 20)

    probs_bytes = int(B) * H * S * S * jnp.dtype(probs_dtype).itemsize
    cost = pl.CostEstimate(
        flops=int(4 * B * S * S * D + 2 * B * S * D * D),
        transcendentals=int(B * H * S * S),
        bytes_accessed=int(
            B * S * D * 4                 # residual input
            + B * S * D * 2 * (2 * nq + 1)  # q read once, k/v re-read per q block
            + B * S * 4                   # mask
            + D * D * 2 + 4 * D * 4       # wo + biases/norm params
            + B * S * D * 4               # output
            + probs_bytes),
    )

    f = pl.pallas_call(
        _attention_kernel,
        grid=(B, nq, G),
        in_specs=in_specs,
        out_specs=out_specs,
        out_shape=out_shape,
        scratch_shapes=scratch_shapes,
        compiler_params=pltpu.CompilerParams(
            # batch and query-block axes are state-free -> megacore-shardable;
            # the head-group axis carries the output accumulator.
            dimension_semantics=("parallel", "parallel", "arbitrary"),
            vmem_limit_bytes=vmem_limit,
        ),
        cost_estimate=cost,
    )
    return f(x_res, q5, k5, v5, mask, wo4, bo2, gamma2, beta2)


def attention_reference(x, mask, params, *, num_heads):
    """Pure-JAX f32 reference matching the PyTorch module."""
    B, S, D = x.shape
    H = num_heads
    hd = D // H
    q = x @ params["wq"] + params["bq"]
    k = x @ params["wk"] + params["bk"]
    v = x @ params["wv"] + params["bv"]

    def split(t):
        return t.reshape(B, S, H, hd).transpose(0, 2, 1, 3)

    qh, kh, vh = split(q), split(k), split(v)
    scores = jnp.einsum("bhqd,bhkd->bhqk", qh, kh) / math.sqrt(hd) + mask
    probs = jax.nn.softmax(scores, axis=-1)
    ctx = jnp.einsum("bhqk,bhkd->bhqd", probs, vh)
    ctx = ctx.transpose(0, 2, 1, 3).reshape(B, S, D)
    attn = ctx @ params["wo"] + params["bo"]
    y = attn + x
    u = jnp.mean(y, axis=-1, keepdims=True)
    s = jnp.mean((y - u) ** 2, axis=-1, keepdims=True)
    out = params["gamma"] * ((y - u) / jnp.sqrt(s + 1e-12)) + params["beta"]
    return out, probs


def make_params(key, hidden_size):
    D = hidden_size
    ks = jax.random.split(key, 9)
    s = 0.02

    def w(k):
        return s * jax.random.normal(k, (D, D), jnp.float32)

    def b(k):
        return s * jax.random.normal(k, (D,), jnp.float32)

    return {
        "wq": w(ks[0]), "bq": b(ks[1]),
        "wk": w(ks[2]), "bk": b(ks[3]),
        "wv": w(ks[4]), "bv": b(ks[5]),
        "wo": w(ks[6]), "bo": b(ks[7]),
        "gamma": jnp.ones((D,), jnp.float32),
        "beta": 0.1 * jax.random.normal(ks[8], (D,), jnp.float32),
    }


if __name__ == "__main__":
    B, S, D, H = 2, 8, 32, 4

    key = jax.random.PRNGKey(0)
    k_x, k_p = jax.random.split(key)

    hidden_states = jax.random.normal(k_x, (B, S, D), jnp.float32)
    # additive mask [B, 1, 1, S]: 0 for visible tokens, -10000 for masked ones
    attention_mask = jnp.zeros((B, 1, 1, S), jnp.float32)
    attention_mask = attention_mask.at[:, :, :, S - 2:].set(-10000.0)

    params = make_params(k_p, D)

    attn_out, attn_probs = attention_forward(
        hidden_states, attention_mask, params, num_heads=H)
    attn_out, attn_probs = jax.block_until_ready((attn_out, attn_probs))

    assert attn_out.shape == (B, S, D)
    assert attn_probs.shape == (B, H, S, S)
    assert bool(jnp.all(jnp.isfinite(attn_out)))
    assert bool(jnp.all(jnp.isfinite(attn_probs.astype(jnp.float32))))

    ref_out, ref_probs = attention_reference(
        hidden_states, attention_mask, params, num_heads=H)
    assert float(jnp.max(jnp.abs(attn_out - ref_out))) < 2e-2
    assert float(jnp.max(jnp.abs(attn_probs.astype(jnp.float32) - ref_probs))) < 2e-2

    print("KERNEL_OK")
</pallas_src>

<mosaic_0001>
module attributes {stable_mosaic.version = 11 : i64} {
  func.func @_attention_kernel(%arg0: i32, %arg1: i32, %arg2: i32, %arg3: memref<1x8x32xf32, #tpu.memory_space<vmem>>, %arg4: memref<1x1x4x8x8xbf16, #tpu.memory_space<vmem>>, %arg5: memref<1x1x4x8x8xbf16, #tpu.memory_space<vmem>>, %arg6: memref<1x1x4x8x8xbf16, #tpu.memory_space<vmem>>, %arg7: memref<1x1x1x8xf32, #tpu.memory_space<vmem>>, %arg8: memref<1x4x8x32xbf16, #tpu.memory_space<vmem>>, %arg9: memref<1x32xf32, #tpu.memory_space<vmem>>, %arg10: memref<1x32xf32, #tpu.memory_space<vmem>>, %arg11: memref<1x32xf32, #tpu.memory_space<vmem>>, %arg12: memref<1x8x32xf32, #tpu.memory_space<vmem>>, %arg13: memref<1x4x8x8xbf16, #tpu.memory_space<vmem>>, %arg14: memref<8x32xf32, #tpu.memory_space<vmem>>) attributes {dimension_semantics = [#tpu.dimension_semantics<parallel>, #tpu.dimension_semantics<parallel>, #tpu.dimension_semantics<arbitrary>], iteration_bounds = array<i64: 2, 1, 1>, scalar_prefetch = 0 : i64, scratch_operands = 1 : i64, tpu.core_type = #tpu.core_type<tc>, window_params = [{transform_indices = @transform_0, window_bounds = array<i64: 1, 8, 32>}, {transform_indices = @transform_1, window_bounds = array<i64: 1, 1, 4, 8, 8>}, {transform_indices = @transform_2, window_bounds = array<i64: 1, 1, 4, 8, 8>}, {transform_indices = @transform_3, window_bounds = array<i64: 1, 1, 4, 8, 8>}, {transform_indices = @transform_4, window_bounds = array<i64: 1, 1, 1, 8>}, {transform_indices = @transform_5, window_bounds = array<i64: 1, 4, 8, 32>}, {pipeline_mode = #tpu.pipeline_mode<synchronous>, transform_indices = @transform_6, window_bounds = array<i64: 1, 32>}, {pipeline_mode = #tpu.pipeline_mode<synchronous>, transform_indices = @transform_7, window_bounds = array<i64: 1, 32>}, {pipeline_mode = #tpu.pipeline_mode<synchronous>, transform_indices = @transform_8, window_bounds = array<i64: 1, 32>}, {transform_indices = @transform_9, window_bounds = array<i64: 1, 8, 32>}, {transform_indices = @transform_10, window_bounds = array<i64: 1, 4, 8, 8>}]} {
    %c0 = arith.constant 0 : index
    %c0_0 = arith.constant 0 : index
    %c0_1 = arith.constant 0 : index
    %c0_2 = arith.constant 0 : index
    %c0_3 = arith.constant 0 : index
    %0 = vector.load %arg4[%c0, %c0_0, %c0_1, %c0_2, %c0_3] : memref<1x1x4x8x8xbf16, #tpu.memory_space<vmem>>, vector<1x1x4x8x8xbf16>
    %1 = vector.shape_cast %0 : vector<1x1x4x8x8xbf16> to vector<4x8x8xbf16>
    %c0_4 = arith.constant 0 : index
    %c0_5 = arith.constant 0 : index
    %c0_6 = arith.constant 0 : index
    %c0_7 = arith.constant 0 : index
    %c0_8 = arith.constant 0 : index
    %2 = vector.load %arg5[%c0_4, %c0_5, %c0_6, %c0_7, %c0_8] : memref<1x1x4x8x8xbf16, #tpu.memory_space<vmem>>, vector<1x1x4x8x8xbf16>
    %3 = vector.shape_cast %2 : vector<1x1x4x8x8xbf16> to vector<4x8x8xbf16>
    %c0_9 = arith.constant 0 : index
    %c0_10 = arith.constant 0 : index
    %c0_11 = arith.constant 0 : index
    %c0_12 = arith.constant 0 : index
    %c0_13 = arith.constant 0 : index
    %4 = vector.load %arg6[%c0_9, %c0_10, %c0_11, %c0_12, %c0_13] : memref<1x1x4x8x8xbf16, #tpu.memory_space<vmem>>, vector<1x1x4x8x8xbf16>
    %5 = vector.shape_cast %4 : vector<1x1x4x8x8xbf16> to vector<4x8x8xbf16>
    %c0_14 = arith.constant 0 : index
    %c0_15 = arith.constant 0 : index
    %c0_16 = arith.constant 0 : index
    %c0_17 = arith.constant 0 : index
    %6 = vector.load %arg7[%c0_14, %c0_15, %c0_16, %c0_17] : memref<1x1x1x8xf32, #tpu.memory_space<vmem>>, vector<1x1x1x8xf32>
    %7 = vector.shape_cast %6 : vector<1x1x1x8xf32> to vector<1x1x8xf32>
    %cst = arith.constant dense<0.000000e+00> : vector<4x8x8xf32>
    %8 = tpu.matmul %1, %3, %cst {dimension_numbers = #tpu.dot_dimension_numbers<[2], [2], [1], [1], [0, 0, 0, 1, 1, 1], [0], [0]>} : vector<4x8x8xbf16>, vector<4x8x8xbf16>, vector<4x8x8xf32> -> vector<4x8x8xf32>
    %9 = vector.broadcast %7 : vector<1x1x8xf32> to vector<4x8x8xf32>
    %10 = arith.addf %8, %9 : vector<4x8x8xf32>
    %cst_18 = arith.constant dense<0xFF800000> : vector<4x8xf32>
    %11 = vector.multi_reduction <maximumf>, %10, %cst_18 [2] : vector<4x8x8xf32> to vector<4x8xf32>
    %12 = vector.shape_cast %11 : vector<4x8xf32> to vector<4x8x1xf32>
    %13 = vector.broadcast %12 : vector<4x8x1xf32> to vector<4x8x8xf32>
    %14 = arith.subf %10, %13 : vector<4x8x8xf32>
    %15 = math.exp %14 : vector<4x8x8xf32>
    %cst_19 = arith.constant dense<0.000000e+00> : vector<4x8xf32>
    %16 = vector.multi_reduction <add>, %15, %cst_19 [2] : vector<4x8x8xf32> to vector<4x8xf32>
    %17 = vector.shape_cast %16 : vector<4x8xf32> to vector<4x8x1xf32>
    %18 = tpu.reciprocal %17 {approx = true} : vector<4x8x1xf32> -> vector<4x8x1xf32>
    %19 = vector.broadcast %18 : vector<4x8x1xf32> to vector<4x8x8xf32>
    %20 = arith.mulf %15, %19 : vector<4x8x8xf32>
    %21 = arith.truncf %20 : vector<4x8x8xf32> to vector<4x8x8xbf16>
    %c0_20 = arith.constant 0 : index
    %c0_21 = arith.constant 0 : index
    %c0_22 = arith.constant 0 : index
    %c0_23 = arith.constant 0 : index
    %22 = vector.load %arg13[%c0_20, %c0_21, %c0_22, %c0_23] : memref<1x4x8x8xbf16, #tpu.memory_space<vmem>>, vector<1x4x8x8xbf16>
    %23 = vector.shape_cast %22 : vector<1x4x8x8xbf16> to vector<4x8x8xbf16>
    %24 = vector.shape_cast %21 : vector<4x8x8xbf16> to vector<1x4x8x8xbf16>
    tpu.vector_store %arg13[%c0_20, %c0_21, %c0_22, %c0_23], %24 {strides = array<i32>} : memref<1x4x8x8xbf16, #tpu.memory_space<vmem>>, vector<1x4x8x8xbf16>,
    %25 = arith.truncf %20 : vector<4x8x8xf32> to vector<4x8x8xbf16>
    %cst_24 = arith.constant dense<0.000000e+00> : vector<4x8x8xf32>
    %26 = tpu.matmul %25, %5, %cst_24 {dimension_numbers = #tpu.dot_dimension_numbers<[2], [1], [1], [2], [0, 0, 0, 1, 1, 2], [0], [0]>} : vector<4x8x8xbf16>, vector<4x8x8xbf16>, vector<4x8x8xf32> -> vector<4x8x8xf32>
    %27 = vector.extract_strided_slice %26 {offsets = [0, 0, 0], sizes = [1, 8, 8], strides = [1, 1, 1]} : vector<4x8x8xf32> to vector<1x8x8xf32>
    %28 = vector.shape_cast %27 : vector<1x8x8xf32> to vector<8x8xf32>
    %29 = arith.truncf %28 : vector<8x8xf32> to vector<8x8xbf16>
    %c0_25 = arith.constant 0 : index
    %c0_26 = arith.constant 0 : index
    %c0_27 = arith.constant 0 : index
    %c0_28 = arith.constant 0 : index
    %30 = vector.load %arg8[%c0_25, %c0_26, %c0_27, %c0_28] : memref<1x4x8x32xbf16, #tpu.memory_space<vmem>>, vector<1x1x8x32xbf16>
    %31 = vector.shape_cast %30 : vector<1x1x8x32xbf16> to vector<8x32xbf16>
    %cst_29 = arith.constant dense<0.000000e+00> : vector<8x32xf32>
    %32 = tpu.matmul %29, %31, %cst_29 {dimension_numbers = #tpu.dot_dimension_numbers<[1], [0], [0], [1], [0, 0, 1, 1], [], []>} : vector<8x8xbf16>, vector<8x32xbf16>, vector<8x32xf32> -> vector<8x32xf32>
    %33 = vector.extract_strided_slice %26 {offsets = [1, 0, 0], sizes = [1, 8, 8], strides = [1, 1, 1]} : vector<4x8x8xf32> to vector<1x8x8xf32>
    %34 = vector.shape_cast %33 : vector<1x8x8xf32> to vector<8x8xf32>
    %35 = arith.truncf %34 : vector<8x8xf32> to vector<8x8xbf16>
    %c0_30 = arith.constant 0 : index
    %c1 = arith.constant 1 : index
    %c0_31 = arith.constant 0 : index
    %c0_32 = arith.constant 0 : index
    %36 = vector.load %arg8[%c0_30, %c1, %c0_31, %c0_32] : memref<1x4x8x32xbf16, #tpu.memory_space<vmem>>, vector<1x1x8x32xbf16>
    %37 = vector.shape_cast %36 : vector<1x1x8x32xbf16> to vector<8x32xbf16>
    %cst_33 = arith.constant dense<0.000000e+00> : vector<8x32xf32>
    %38 = tpu.matmul %35, %37, %cst_33 {dimension_numbers = #tpu.dot_dimension_numbers<[1], [0], [0], [1], [0, 0, 1, 1], [], []>} : vector<8x8xbf16>, vector<8x32xbf16>, vector<8x32xf32> -> vector<8x32xf32>
    %39 = arith.addf %32, %38 : vector<8x32xf32>
    %40 = vector.extract_strided_slice %26 {offsets = [2, 0, 0], sizes = [1, 8, 8], strides = [1, 1, 1]} : vector<4x8x8xf32> to vector<1x8x8xf32>
    %41 = vector.shape_cast %40 : vector<1x8x8xf32> to vector<8x8xf32>
    %42 = arith.truncf %41 : vector<8x8xf32> to vector<8x8xbf16>
    %c0_34 = arith.constant 0 : index
    %c2 = arith.constant 2 : index
    %c0_35 = arith.constant 0 : index
    %c0_36 = arith.constant 0 : index
    %43 = vector.load %arg8[%c0_34, %c2, %c0_35, %c0_36] : memref<1x4x8x32xbf16, #tpu.memory_space<vmem>>, vector<1x1x8x32xbf16>
    %44 = vector.shape_cast %43 : vector<1x1x8x32xbf16> to vector<8x32xbf16>
    %cst_37 = arith.constant dense<0.000000e+00> : vector<8x32xf32>
    %45 = tpu.matmul %42, %44, %cst_37 {dimension_numbers = #tpu.dot_dimension_numbers<[1], [0], [0], [1], [0, 0, 1, 1], [], []>} : vector<8x8xbf16>, vector<8x32xbf16>, vector<8x32xf32> -> vector<8x32xf32>
    %46 = arith.addf %39, %45 : vector<8x32xf32>
    %47 = vector.extract_strided_slice %26 {offsets = [3, 0, 0], sizes = [1, 8, 8], strides = [1, 1, 1]} : vector<4x8x8xf32> to vector<1x8x8xf32>
    %48 = vector.shape_cast %47 : vector<1x8x8xf32> to vector<8x8xf32>
    %49 = arith.truncf %48 : vector<8x8xf32> to vector<8x8xbf16>
    %c0_38 = arith.constant 0 : index
    %c3 = arith.constant 3 : index
    %c0_39 = arith.constant 0 : index
    %c0_40 = arith.constant 0 : index
    %50 = vector.load %arg8[%c0_38, %c3, %c0_39, %c0_40] : memref<1x4x8x32xbf16, #tpu.memory_space<vmem>>, vector<1x1x8x32xbf16>
    %51 = vector.shape_cast %50 : vector<1x1x8x32xbf16> to vector<8x32xbf16>
    %cst_41 = arith.constant dense<0.000000e+00> : vector<8x32xf32>
    %52 = tpu.matmul %49, %51, %cst_41 {dimension_numbers = #tpu.dot_dimension_numbers<[1], [0], [0], [1], [0, 0, 1, 1], [], []>} : vector<8x8xbf16>, vector<8x32xbf16>, vector<8x32xf32> -> vector<8x32xf32>
    %53 = arith.addf %46, %52 : vector<8x32xf32>
    %c0_i32 = arith.constant 0 : i32
    %54 = arith.cmpi eq, %arg2, %c0_i32 : i32
    %55 = arith.extui %54 : i1 to i32
    %c0_i32_42 = arith.constant 0 : i32
    %56 = arith.cmpi ne, %55, %c0_i32_42 : i32
    scf.if %56 {
      %c0_47 = arith.constant 0 : index
      %c0_48 = arith.constant 0 : index
      %63 = vector.load %arg14[%c0_47, %c0_48] : memref<8x32xf32, #tpu.memory_space<vmem>>, vector<8x32xf32>
      tpu.vector_store %arg14[%c0_47, %c0_48], %53 {strides = array<i32>} : memref<8x32xf32, #tpu.memory_space<vmem>>, vector<8x32xf32>,
    } else {
    }
    %c0_i32_43 = arith.constant 0 : i32
    %57 = arith.cmpi ne, %arg2, %c0_i32_43 : i32
    %58 = arith.extui %57 : i1 to i32
    %c0_i32_44 = arith.constant 0 : i32
    %59 = arith.cmpi ne, %58, %c0_i32_44 : i32
    scf.if %59 {
      %c0_47 = arith.constant 0 : index
      %c0_48 = arith.constant 0 : index
      %63 = vector.load %arg14[%c0_47, %c0_48] : memref<8x32xf32, #tpu.memory_space<vmem>>, vector<8x32xf32>
      %64 = arith.addf %63, %53 : vector<8x32xf32>
      %c0_49 = arith.constant 0 : index
      %c0_50 = arith.constant 0 : index
      %65 = vector.load %arg14[%c0_49, %c0_50] : memref<8x32xf32, #tpu.memory_space<vmem>>, vector<8x32xf32>
      tpu.vector_store %arg14[%c0_49, %c0_50], %64 {strides = array<i32>} : memref<8x32xf32, #tpu.memory_space<vmem>>, vector<8x32xf32>,
    } else {
    }
    %c0_i32_45 = arith.constant 0 : i32
    %60 = arith.cmpi eq, %arg2, %c0_i32_45 : i32
    %61 = arith.extui %60 : i1 to i32
    %c0_i32_46 = arith.constant 0 : i32
    %62 = arith.cmpi ne, %61, %c0_i32_46 : i32
    scf.if %62 {
      %c0_47 = arith.constant 0 : index
      %c0_48 = arith.constant 0 : index
      %63 = vector.load %arg14[%c0_47, %c0_48] : memref<8x32xf32, #tpu.memory_space<vmem>>, vector<8x32xf32>
      %c0_49 = arith.constant 0 : index
      %c0_50 = arith.constant 0 : index
      %64 = vector.load %arg9[%c0_49, %c0_50] : memref<1x32xf32, #tpu.memory_space<vmem>>, vector<1x32xf32>
      %65 = vector.broadcast %64 : vector<1x32xf32> to vector<8x32xf32>
      %66 = arith.addf %63, %65 : vector<8x32xf32>
      %c0_51 = arith.constant 0 : index
      %c0_52 = arith.constant 0 : index
      %c0_53 = arith.constant 0 : index
      %67 = vector.load %arg3[%c0_51, %c0_52, %c0_53] : memref<1x8x32xf32, #tpu.memory_space<vmem>>, vector<1x8x32xf32>
      %68 = vector.shape_cast %67 : vector<1x8x32xf32> to vector<8x32xf32>
      %69 = arith.addf %66, %68 : vector<8x32xf32>
      %cst_54 = arith.constant dense<0.000000e+00> : vector<8xf32>
      %70 = vector.multi_reduction <add>, %69, %cst_54 [1] : vector<8x32xf32> to vector<8xf32>
      %71 = vector.shape_cast %70 : vector<8xf32> to vector<8x1xf32>
      %cst_55 = arith.constant 3.200000e+01 : f32
      %72 = vector.broadcast %cst_55 : f32 to vector<8x1xf32>
      %73 = arith.divf %71, %72 : vector<8x1xf32>
      %74 = vector.broadcast %73 : vector<8x1xf32> to vector<8x32xf32>
      %75 = arith.subf %69, %74 : vector<8x32xf32>
      %76 = arith.mulf %75, %75 : vector<8x32xf32>
      %cst_56 = arith.constant dense<0.000000e+00> : vector<8xf32>
      %77 = vector.multi_reduction <add>, %76, %cst_56 [1] : vector<8x32xf32> to vector<8xf32>
      %78 = vector.shape_cast %77 : vector<8xf32> to vector<8x1xf32>
      %cst_57 = arith.constant 3.200000e+01 : f32
      %79 = vector.broadcast %cst_57 : f32 to vector<8x1xf32>
      %80 = arith.divf %78, %79 : vector<8x1xf32>
      %c0_58 = arith.constant 0 : index
      %c0_59 = arith.constant 0 : index
      %81 = vector.load %arg10[%c0_58, %c0_59] : memref<1x32xf32, #tpu.memory_space<vmem>>, vector<1x32xf32>
      %cst_60 = arith.constant 9.99999996E-13 : f32
      %82 = vector.broadcast %cst_60 : f32 to vector<8x1xf32>
      %83 = arith.addf %80, %82 : vector<8x1xf32>
      %84 = math.rsqrt %83 : vector<8x1xf32>
      %85 = vector.broadcast %84 : vector<8x1xf32> to vector<8x32xf32>
      %86 = arith.mulf %75, %85 : vector<8x32xf32>
      %87 = vector.broadcast %81 : vector<1x32xf32> to vector<8x32xf32>
      %88 = arith.mulf %87, %86 : vector<8x32xf32>
      %c0_61 = arith.constant 0 : index
      %c0_62 = arith.constant 0 : index
      %89 = vector.load %arg11[%c0_61, %c0_62] : memref<1x32xf32, #tpu.memory_space<vmem>>, vector<1x32xf32>
      %90 = vector.broadcast %89 : vector<1x32xf32> to vector<8x32xf32>
      %91 = arith.addf %88, %90 : vector<8x32xf32>
      %c0_63 = arith.constant 0 : index
      %c0_64 = arith.constant 0 : index
      %c0_65 = arith.constant 0 : index
      %92 = vector.load %arg12[%c0_63, %c0_64, %c0_65] : memref<1x8x32xf32, #tpu.memory_space<vmem>>, vector<1x8x32xf32>
      %93 = vector.shape_cast %92 : vector<1x8x32xf32> to vector<8x32xf32>
      %94 = vector.shape_cast %91 : vector<8x32xf32> to vector<1x8x32xf32>
      tpu.vector_store %arg12[%c0_63, %c0_64, %c0_65], %94 {strides = array<i32>} : memref<1x8x32xf32, #tpu.memory_space<vmem>>, vector<1x8x32xf32>,
    } else {
    }
    return
  }
  func.func @transform_0(%arg0: i32, %arg1: i32, %arg2: i32) -> (i32, i32, i32) {
    %c0_i32 = arith.constant 0 : i32
    %c0_i32_0 = arith.constant 0 : i32
    return %arg0, %arg1, %c0_i32 : i32, i32, i32
  }
  func.func @transform_1(%arg0: i32, %arg1: i32, %arg2: i32) -> (i32, i32, i32, i32, i32) {
    %c0_i32 = arith.constant 0 : i32
    %c0_i32_0 = arith.constant 0 : i32
    %c0_i32_1 = arith.constant 0 : i32
    return %arg0, %arg2, %c0_i32, %arg1, %c0_i32_0 : i32, i32, i32, i32, i32
  }
  func.func @transform_2(%arg0: i32, %arg1: i32, %arg2: i32) -> (i32, i32, i32, i32, i32) {
    %c0_i32 = arith.constant 0 : i32
    %c0_i32_0 = arith.constant 0 : i32
    %c0_i32_1 = arith.constant 0 : i32
    %c0_i32_2 = arith.constant 0 : i32
    return %arg0, %arg2, %c0_i32, %c0_i32_0, %c0_i32_1 : i32, i32, i32, i32, i32
  }
  func.func @transform_3(%arg0: i32, %arg1: i32, %arg2: i32) -> (i32, i32, i32, i32, i32) {
    %c0_i32 = arith.constant 0 : i32
    %c0_i32_0 = arith.constant 0 : i32
    %c0_i32_1 = arith.constant 0 : i32
    %c0_i32_2 = arith.constant 0 : i32
    return %arg0, %arg2, %c0_i32, %c0_i32_0, %c0_i32_1 : i32, i32, i32, i32, i32
  }
  func.func @transform_4(%arg0: i32, %arg1: i32, %arg2: i32) -> (i32, i32, i32, i32) {
    %c0_i32 = arith.constant 0 : i32
    %c0_i32_0 = arith.constant 0 : i32
    %c0_i32_1 = arith.constant 0 : i32
    %c0_i32_2 = arith.constant 0 : i32
    return %arg0, %c0_i32, %c0_i32_0, %c0_i32_1 : i32, i32, i32, i32
  }
  func.func @transform_5(%arg0: i32, %arg1: i32, %arg2: i32) -> (i32, i32, i32, i32) {
    %c0_i32 = arith.constant 0 : i32
    %c0_i32_0 = arith.constant 0 : i32
    %c0_i32_1 = arith.constant 0 : i32
    %c0_i32_2 = arith.constant 0 : i32
    return %arg2, %c0_i32, %c0_i32_0, %c0_i32_1 : i32, i32, i32, i32
  }
  func.func @transform_6(%arg0: i32, %arg1: i32, %arg2: i32) -> (i32, i32) {
    %c0_i32 = arith.constant 0 : i32
    %c0_i32_0 = arith.constant 0 : i32
    %c0_i32_1 = arith.constant 0 : i32
    return %c0_i32, %c0_i32_0 : i32, i32
  }
  func.func @transform_7(%arg0: i32, %arg1: i32, %arg2: i32) -> (i32, i32) {
    %c0_i32 = arith.constant 0 : i32
    %c0_i32_0 = arith.constant 0 : i32
    %c0_i32_1 = arith.constant 0 : i32
    return %c0_i32, %c0_i32_0 : i32, i32
  }
  func.func @transform_8(%arg0: i32, %arg1: i32, %arg2: i32) -> (i32, i32) {
    %c0_i32 = arith.constant 0 : i32
    %c0_i32_0 = arith.constant 0 : i32
    %c0_i32_1 = arith.constant 0 : i32
    return %c0_i32, %c0_i32_0 : i32, i32
  }
  func.func @transform_9(%arg0: i32, %arg1: i32, %arg2: i32) -> (i32, i32, i32) {
    %c0_i32 = arith.constant 0 : i32
    %c0_i32_0 = arith.constant 0 : i32
    return %arg0, %arg1, %c0_i32 : i32, i32, i32
  }
  func.func @transform_10(%arg0: i32, %arg1: i32, %arg2: i32) -> (i32, i32, i32, i32) {
    %c0_i32 = arith.constant 0 : i32
    %c0_i32_0 = arith.constant 0 : i32
    return %arg0, %arg2, %arg1, %c0_i32 : i32, i32, i32, i32
  }
}

</mosaic_0001>

<llo_original>
// kernel: tpu_custom_call.1
$region0: #{tpu_custom_call.1}
  #allocation0 [shape = 'u32[]', space=smem, size = 0x4, offset = 0x4, fixed_abs, tag = 'smem constant byte address 0x4 - core index']
  #allocation1 [shape = 'u32[72,128]{1,0:T(1,128)}', space=vmem, size = 0x9000, scoped, tag = 'internal scratch']
  #allocation2 [shape = 'f32[8,32]{1,0:T(8,128)}', space=vmem, size = 0x1000, scoped, tag = 'scratch operand']
  %s0 = inlined_call_operand.hbm [shape: f32[2,8,32], index: 0, kind: input, shape index: {}]
  %s1 = inlined_call_operand.hbm [shape: bf16[2,1,4,8,8], index: 1, kind: input, shape index: {}]
  %s2 = inlined_call_operand.hbm [shape: bf16[2,1,4,8,8], index: 2, kind: input, shape index: {}]
  %s3 = inlined_call_operand.hbm [shape: bf16[2,1,4,8,8], index: 3, kind: input, shape index: {}]
  %s4 = inlined_call_operand.vmem [shape: f32[2,1,1,8], index: 4, kind: input, shape index: {}]
  %s5 = inlined_call_operand.hbm [shape: bf16[1,4,8,32], index: 5, kind: input, shape index: {}]
  %s6 = inlined_call_operand.vmem [shape: f32[1,32], index: 6, kind: input, shape index: {}]
  %s7 = inlined_call_operand.vmem [shape: f32[1,32], index: 7, kind: input, shape index: {}]
  %s8 = inlined_call_operand.vmem [shape: f32[1,32], index: 8, kind: input, shape index: {}]
  %s9 = inlined_call_operand.hbm [shape: f32[2,8,32], index: 9, kind: output, shape index: {0}]
  %s10 = inlined_call_operand.hbm [shape: bf16[2,4,8,8], index: 10, kind: output, shape index: {1}]
  %11 = xla_tuple %s9, %s10
  %s12 = sld [smem:[#allocation0]]
  $region109: #{tpu_custom_call.1} parent=0
    _
  %s14 = ssub.s32 1, %s12
  %s15 = scalar_select 0, %s14, %s12
  $region1: #{tpu_custom_call.1} parent=0
    #allocation3 [shape = 'u8[8192]{0}', space=vmem, size = 0x2000, scoped, tag = 'input window, operand 0']
    #allocation4 [shape = 's32[2]{0}', space=sflag, size = 0x8, scoped, tag = 'scoped memory for tpu_custom_call.1']
    #allocation5 [shape = 's32[2]{0}', space=sflag, size = 0x8, scoped, tag = 'scoped memory for tpu_custom_call.1']
    #allocation6 [shape = 'u8[16384]{0}', space=vmem, size = 0x4000, scoped, tag = 'input window, operand 1']
    #allocation7 [shape = 's32[2]{0}', space=sflag, size = 0x8, scoped, tag = 'scoped memory for tpu_custom_call.1']
    #allocation8 [shape = 'u8[16384]{0}', space=vmem, size = 0x4000, scoped, tag = 'input window, operand 2']
    #allocation9 [shape = 'u8[16384]{0}', space=vmem, size = 0x4000, scoped, tag = 'input window, operand 3']
    #allocation10 [shape = 's32[2]{0}', space=sflag, size = 0x8, scoped, tag = 'scoped memory for tpu_custom_call.1']
    #allocation11 [shape = 'u8[8192]{0}', space=vmem, size = 0x2000, scoped, tag = 'input window, operand 5, single buffered']
    #allocation12 [shape = 'u8[8192]{0}', space=vmem, size = 0x2000, scoped, tag = 'output window, operand 0']
    #allocation13 [shape = 'u8[16384]{0}', space=vmem, size = 0x4000, scoped, tag = 'output window, operand 1']
    #allocation14 [shape = 's32[2]{0}', space=sflag, size = 0x8, scoped, tag = 'scoped memory for tpu_custom_call.1']
    %16 = vsyncpa [#allocation4], 0
    %s17 = scalar_lea.sflag [#allocation4], 1
    %18 = vsyncpa %s17, 0
    %19 = vsyncpa [#allocation7], 0
    %s20 = scalar_lea.sflag [#allocation7], 1
    %21 = vsyncpa %s20, 0
    %22 = vsyncpa [#allocation10], 0
    %s23 = scalar_lea.sflag [#allocation10], 1
    %24 = vsyncpa %s23, 0
    %25 = vsyncpa [#allocation5], 0
    %s26 = scalar_lea.sflag [#allocation5], 1
    %27 = vsyncpa %s26, 0
    %28 = vsyncpa [#allocation14], 0
    %s29 = scalar_lea.sflag [#allocation14], 1
    %30 = vsyncpa %s29, 0
    loop: start=0, step=1, limit=4
    $region2: #{tpu_custom_call.1} parent=1 // loop_pre_header
      _
    $region3: #{tpu_custom_call.1} parent=1 // loop_header
      %s32 = sphi 0, %s36
      %p33 = scmp.ge.s32.totalorder %s32, 4
      %s39 = sphi 0, %s58
      %s40 = sphi 0, %s54
      %s41 = sphi 0, %s50
      %s42 = sphi 0, %s39
      %s43 = sphi 0, %s40
      %s44 = sphi 0, %s41
      %s45 = sphi 0, %s42
      %s46 = sphi 0, %s43
      %s47 = sphi 0, %s44
      %s63 = sphi 0, %s65
      %s66 = sphi 0, %s63
      %s67 = sphi 0, %s66
      %s83 = sphi 0, %s67
      %s93 = sphi 0, %s95
      %s96 = sphi 0, %s93
      %s97 = sphi 0, %s96
      %s113 = sphi 0, %s97
      %s121 = sphi 0, %s123
      %s124 = sphi 0, %s121
      %s125 = sphi 0, %s124
      %s141 = sphi 0, %s125
      %s149 = sphi 0, %s151
      %s152 = sphi 0, %s149
      %s153 = sphi 0, %s152
      %s169 = sphi 0, %s153
      %s175 = sphi 0, %s177
      %s178 = sphi 0, %s175
      %s179 = sphi 0, %s178
      %s195 = sphi 0, %s179
      %s201 = sphi 0, %s203
      %s204 = sphi 0, %s201
      %s205 = sphi 0, %s204
      %s221 = sphi 0, %s205
      %s225 = sphi 0, %s225
      %s227 = sphi 0, %s225
      %s228 = sphi 0, %s227
      %s242 = sphi 0, %s228
      %s246 = sphi 0, %s246
      %s248 = sphi 0, %s246
      %s249 = sphi 0, %s248
      %s263 = sphi 0, %s249
      %s267 = sphi 0, %s267
      %s269 = sphi 0, %s267
      %s270 = sphi 0, %s269
      %s284 = sphi 0, %s270
      %s292 = sphi 0, %s294
      %s295 = sphi 0, %s292
      %s296 = sphi 0, %s295
      %s312 = sphi 0, %s296
      %s322 = sphi 0, %s324
      %s325 = sphi 0, %s322
      %s326 = sphi 0, %s325
      %s342 = sphi 0, %s326
    $region4: #{tpu_custom_call.1} parent=1 // loop_header_branch
      %35 = sbr.rel (%p33) target = $region8
    $region5: #{tpu_custom_call.1} parent=1 // loop_body
      %s37 = ssub.s32 %s32, 1
      %s38 = ssub.s32 %s32, 2
      %s48 = sadd.s32 1, %s41
      %p49 = scmp.ge.s32.totalorder %s48, 1
      %s50 = scalar_select %p49, 0, %s48
      %s51 = sadd.s32 1, %s40
      %s52 = scalar_select %p49, %s51, %s40
      %p53 = scmp.ge.s32.totalorder %s52, 1
      %s54 = scalar_select %p53, 0, %s52
      %s55 = sadd.s32 1, %s39
      %s56 = scalar_select %p53, %s55, %s39
      %p57 = scmp.ge.s32.totalorder %s56, 2
      %s58 = scalar_select %p57, 0, %s56
      %s59 = ssub.s32 %s39, %s58
      %s60 = ssub.s32 %s40, %s54
      %s61 = sor.u32 %s59, %s60
      %p62 = scmp.eq.s32.totalorder %s61, 0
      %s64 = sadd.s32 %s63, 1
      %s65 = scalar_select %p62, %s63, %s64
      %p68 = pneg %p62
      %p69 = scmp.eq.s32.totalorder %s32, 1
      %p70 = por %p68, %p69
      %p71 = scmp.ne.s32.totalorder %s63, %s66
      %p72 = scmp.eq.s32.totalorder %s32, 0
      %p73 = por %p71, %p72
      %p74 = scmp.ne.s32.totalorder %s63, %s66
      %p75 = scmp.eq.s32.totalorder %s37, 1
      %p76 = por %p74, %p75
      %p77 = scmp.ne.s32.totalorder %s66, %s67
      %p78 = scmp.eq.s32.totalorder %s37, 0
      %p79 = por %p77, %p78
      %p80 = scmp.ne.s32.totalorder %s66, %s67
      %p81 = scmp.eq.s32.totalorder %s38, 1
      %p82 = por %p80, %p81
      %p84 = scmp.ne.s32.totalorder %s67, %s83
      %p85 = scmp.eq.s32.totalorder %s38, 0
      %p86 = por %p84, %p85
      %s87 = ssub.s32 %s39, %s58
      %s88 = ssub.s32 %s41, %s50
      %s89 = sor.u32 %s87, %s88
      %s90 = ssub.s32 %s40, %s54
      %s91 = sor.u32 %s89, %s90
      %p92 = scmp.eq.s32.totalorder %s91, 0
      %s94 = sadd.s32 %s93, 1
      %s95 = scalar_select %p92, %s93, %s94
      %p98 = pneg %p92
      %p99 = scmp.eq.s32.totalorder %s32, 1
      %p100 = por %p98, %p99
      %p101 = scmp.ne.s32.totalorder %s93, %s96
      %p102 = scmp.eq.s32.totalorder %s32, 0
      %p103 = por %p101, %p102
      %p104 = scmp.ne.s32.totalorder %s93, %s96
      %p105 = scmp.eq.s32.totalorder %s37, 1
      %p106 = por %p104, %p105
      %p107 = scmp.ne.s32.totalorder %s96, %s97
      %p108 = scmp.eq.s32.totalorder %s37, 0
      %p109 = por %p107, %p108
      %p110 = scmp.ne.s32.totalorder %s96, %s97
      %p111 = scmp.eq.s32.totalorder %s38, 1
      %p112 = por %p110, %p111
      %p114 = scmp.ne.s32.totalorder %s97, %s113
      %p115 = scmp.eq.s32.totalorder %s38, 0
      %p116 = por %p114, %p115
      %s117 = ssub.s32 %s39, %s58
      %s118 = ssub.s32 %s41, %s50
      %s119 = sor.u32 %s117, %s118
      %p120 = scmp.eq.s32.totalorder %s119, 0
      %s122 = sadd.s32 %s121, 1
      %s123 = scalar_select %p120, %s121, %s122
      %p126 = pneg %p120
      %p127 = scmp.eq.s32.totalorder %s32, 1
      %p128 = por %p126, %p127
      %p129 = scmp.ne.s32.totalorder %s121, %s124
      %p130 = scmp.eq.s32.totalorder %s32, 0
      %p131 = por %p129, %p130
      %p132 = scmp.ne.s32.totalorder %s121, %s124
      %p133 = scmp.eq.s32.totalorder %s37, 1
      %p134 = por %p132, %p133
      %p135 = scmp.ne.s32.totalorder %s124, %s125
      %p136 = scmp.eq.s32.totalorder %s37, 0
      %p137 = por %p135, %p136
      %p138 = scmp.ne.s32.totalorder %s124, %s125
      %p139 = scmp.eq.s32.totalorder %s38, 1
      %p140 = por %p138, %p139
      %p142 = scmp.ne.s32.totalorder %s125, %s141
      %p143 = scmp.eq.s32.totalorder %s38, 0
      %p144 = por %p142, %p143
      %s145 = ssub.s32 %s39, %s58
      %s146 = ssub.s32 %s41, %s50
      %s147 = sor.u32 %s145, %s146
      %p148 = scmp.eq.s32.totalorder %s147, 0
      %s150 = sadd.s32 %s149, 1
      %s151 = scalar_select %p148, %s149, %s150
      %p154 = pneg %p148
      %p155 = scmp.eq.s32.totalorder %s32, 1
      %p156 = por %p154, %p155
      %p157 = scmp.ne.s32.totalorder %s149, %s152
      %p158 = scmp.eq.s32.totalorder %s32, 0
      %p159 = por %p157, %p158
      %p160 = scmp.ne.s32.totalorder %s149, %s152
      %p161 = scmp.eq.s32.totalorder %s37, 1
      %p162 = por %p160, %p161
      %p163 = scmp.ne.s32.totalorder %s152, %s153
      %p164 = scmp.eq.s32.totalorder %s37, 0
      %p165 = por %p163, %p164
      %p166 = scmp.ne.s32.totalorder %s152, %s153
      %p167 = scmp.eq.s32.totalorder %s38, 1
      %p168 = por %p166, %p167
      %p170 = scmp.ne.s32.totalorder %s153, %s169
      %p171 = scmp.eq.s32.totalorder %s38, 0
      %p172 = por %p170, %p171
      %s173 = ssub.s32 %s39, %s58
      %p174 = scmp.eq.s32.totalorder %s173, 0
      %s176 = sadd.s32 %s175, 1
      %s177 = scalar_select %p174, %s175, %s176
      %p180 = pneg %p174
      %p181 = scmp.eq.s32.totalorder %s32, 1
      %p182 = por %p180, %p181
      %p183 = scmp.ne.s32.totalorder %s175, %s178
      %p184 = scmp.eq.s32.totalorder %s32, 0
      %p185 = por %p183, %p184
      %p186 = scmp.ne.s32.totalorder %s175, %s178
      %p187 = scmp.eq.s32.totalorder %s37, 1
      %p188 = por %p186, %p187
      %p189 = scmp.ne.s32.totalorder %s178, %s179
      %p190 = scmp.eq.s32.totalorder %s37, 0
      %p191 = por %p189, %p190
      %p192 = scmp.ne.s32.totalorder %s178, %s179
      %p193 = scmp.eq.s32.totalorder %s38, 1
      %p194 = por %p192, %p193
      %p196 = scmp.ne.s32.totalorder %s179, %s195
      %p197 = scmp.eq.s32.totalorder %s38, 0
      %p198 = por %p196, %p197
      %s199 = ssub.s32 %s41, %s50
      %p200 = scmp.eq.s32.totalorder %s199, 0
      %s202 = sadd.s32 %s201, 1
      %s203 = scalar_select %p200, %s201, %s202
      %p206 = pneg %p200
      %p207 = scmp.eq.s32.totalorder %s32, 1
      %p208 = por %p206, %p207
      %p209 = scmp.ne.s32.totalorder %s201, %s204
      %p210 = scmp.eq.s32.totalorder %s32, 0
      %p211 = por %p209, %p210
      %p212 = scmp.ne.s32.totalorder %s201, %s204
      %p213 = scmp.eq.s32.totalorder %s37, 1
      %p214 = por %p212, %p213
      %p215 = scmp.ne.s32.totalorder %s204, %s205
      %p216 = scmp.eq.s32.totalorder %s37, 0
      %p217 = por %p215, %p216
      %p218 = scmp.ne.s32.totalorder %s204, %s205
      %p219 = scmp.eq.s32.totalorder %s38, 1
      %p220 = por %p218, %p219
      %p222 = scmp.ne.s32.totalorder %s205, %s221
      %p223 = scmp.eq.s32.totalorder %s38, 0
      %p224 = por %p222, %p223
      %s226 = sadd.s32 %s225, 1
      %p229 = scmp.eq.s32.totalorder %s32, 1
      %p230 = scmp.ne.s32.totalorder %s225, %s227
      %p231 = scmp.eq.s32.totalorder %s32, 0
      %p232 = por %p230, %p231
      %p233 = scmp.ne.s32.totalorder %s225, %s227
      %p234 = scmp.eq.s32.totalorder %s37, 1
      %p235 = por %p233, %p234
      %p236 = scmp.ne.s32.totalorder %s227, %s228
      %p237 = scmp.eq.s32.totalorder %s37, 0
      %p238 = por %p236, %p237
      %p239 = scmp.ne.s32.totalorder %s227, %s228
      %p240 = scmp.eq.s32.totalorder %s38, 1
      %p241 = por %p239, %p240
      %p243 = scmp.ne.s32.totalorder %s228, %s242
      %p244 = scmp.eq.s32.totalorder %s38, 0
      %p245 = por %p243, %p244
      %s247 = sadd.s32 %s246, 1
      %p250 = scmp.eq.s32.totalorder %s32, 1
      %p251 = scmp.ne.s32.totalorder %s246, %s248
      %p252 = scmp.eq.s32.totalorder %s32, 0
      %p253 = por %p251, %p252
      %p254 = scmp.ne.s32.totalorder %s246, %s248
      %p255 = scmp.eq.s32.totalorder %s37, 1
      %p256 = por %p254, %p255
      %p257 = scmp.ne.s32.totalorder %s248, %s249
      %p258 = scmp.eq.s32.totalorder %s37, 0
      %p259 = por %p257, %p258
      %p260 = scmp.ne.s32.totalorder %s248, %s249
      %p261 = scmp.eq.s32.totalorder %s38, 1
      %p262 = por %p260, %p261
      %p264 = scmp.ne.s32.totalorder %s249, %s263
      %p265 = scmp.eq.s32.totalorder %s38, 0
      %p266 = por %p264, %p265
      %s268 = sadd.s32 %s267, 1
      %p271 = scmp.eq.s32.totalorder %s32, 1
      %p272 = scmp.ne.s32.totalorder %s267, %s269
      %p273 = scmp.eq.s32.totalorder %s32, 0
      %p274 = por %p272, %p273
      %p275 = scmp.ne.s32.totalorder %s267, %s269
      %p276 = scmp.eq.s32.totalorder %s37, 1
      %p277 = por %p275, %p276
      %p278 = scmp.ne.s32.totalorder %s269, %s270
      %p279 = scmp.eq.s32.totalorder %s37, 0
      %p280 = por %p278, %p279
      %p281 = scmp.ne.s32.totalorder %s269, %s270
      %p282 = scmp.eq.s32.totalorder %s38, 1
      %p283 = por %p281, %p282
      %p285 = scmp.ne.s32.totalorder %s270, %s284
      %p286 = scmp.eq.s32.totalorder %s38, 0
      %p287 = por %p285, %p286
      %s288 = ssub.s32 %s39, %s58
      %s289 = ssub.s32 %s40, %s54
      %s290 = sor.u32 %s288, %s289
      %p291 = scmp.eq.s32.totalorder %s290, 0
      %s293 = sadd.s32 %s292, 1
      %s294 = scalar_select %p291, %s292, %s293
      %p297 = pneg %p291
      %p298 = scmp.eq.s32.totalorder %s32, 1
      %p299 = por %p297, %p298
      %p300 = scmp.ne.s32.totalorder %s292, %s295
      %p301 = scmp.eq.s32.totalorder %s32, 0
      %p302 = por %p300, %p301
      %p303 = scmp.ne.s32.totalorder %s292, %s295
      %p304 = scmp.eq.s32.totalorder %s37, 1
      %p305 = por %p303, %p304
      %p306 = scmp.ne.s32.totalorder %s295, %s296
      %p307 = scmp.eq.s32.totalorder %s37, 0
      %p308 = por %p306, %p307
      %p309 = scmp.ne.s32.totalorder %s295, %s296
      %p310 = scmp.eq.s32.totalorder %s38, 1
      %p311 = por %p309, %p310
      %p313 = scmp.ne.s32.totalorder %s296, %s312
      %p314 = scmp.eq.s32.totalorder %s38, 0
      %p315 = por %p313, %p314
      %s316 = ssub.s32 %s39, %s58
      %s317 = ssub.s32 %s41, %s50
      %s318 = sor.u32 %s316, %s317
      %s319 = ssub.s32 %s40, %s54
      %s320 = sor.u32 %s318, %s319
      %p321 = scmp.eq.s32.totalorder %s320, 0
      %s323 = sadd.s32 %s322, 1
      %s324 = scalar_select %p321, %s322, %s323
      %p327 = pneg %p321
      %p328 = scmp.eq.s32.totalorder %s32, 1
      %p329 = por %p327, %p328
      %p330 = scmp.ne.s32.totalorder %s322, %s325
      %p331 = scmp.eq.s32.totalorder %s32, 0
      %p332 = por %p330, %p331
      %p333 = scmp.ne.s32.totalorder %s322, %s325
      %p334 = scmp.eq.s32.totalorder %s37, 1
      %p335 = por %p333, %p334
      %p336 = scmp.ne.s32.totalorder %s325, %s326
      %p337 = scmp.eq.s32.totalorder %s37, 0
      %p338 = por %p336, %p337
      %p339 = scmp.ne.s32.totalorder %s325, %s326
      %p340 = scmp.eq.s32.totalorder %s38, 1
      %p341 = por %p339, %p340
      %p343 = scmp.ne.s32.totalorder %s326, %s342
      %p344 = scmp.eq.s32.totalorder %s38, 0
      %p345 = por %p343, %p344
      %p346 = scmp.le.s32.totalorder 1, %s32
      %p347 = scmp.lt.s32.totalorder %s32, 3
      %p348 = pnand %p346, %p347
      %p349 = pneg %p348
      // Predicated region
      $region9: #{tpu_custom_call.1} parent=5 // pred_check
        _
      $region10: #{tpu_custom_call.1} parent=5 // pred_check_branch
        %351 = sbr.rel (%p348) target = $region12
      $region11: #{tpu_custom_call.1} parent=5 // pred_region
        %s352 = ssub.s32 %s32, 1
        // Predicated region
        $region13: #{tpu_custom_call.1} parent=11 // pred_check
          %p353 = pneg %p217
        $region14: #{tpu_custom_call.1} parent=11 // pred_check_branch
          %355 = sbr.rel (%p353) target = $region16
        $region15: #{tpu_custom_call.1} parent=11 // pred_region
          %357 = vsyncadd [#allocation10], 0
          %s358 = smul.addr %s44, 4
          %s359 = smul.addr %s358, 4
          %s360 = scalar_lea.hbm %s5, %s359
          %s361 = sshll.u32 %s360, 4
          %s362 = int_to_ptr.hbm [resolvable:$true] %s361
          %s363 = sshll.u32 [#allocation11], 4
          %s364 = int_to_ptr.vmem [resolvable:$true] %s363
          %369 = dma.hbm_to_vmem [thread:$0]  %s362, 256, %s364, [#allocation10], 64, 64, 4
        $region16: #{tpu_custom_call.1} parent=11 // pred_fallthru
          _
        // Predicated region
        $region17: #{tpu_custom_call.1} parent=11 // pred_check
          %p370 = pneg %p238
        $region18: #{tpu_custom_call.1} parent=11 // pred_check_branch
          %372 = sbr.rel (%p370) target = $region20
        $region19: #{tpu_custom_call.1} parent=11 // pred_region
          _
        $region20: #{tpu_custom_call.1} parent=11 // pred_fallthru
          _
        // Predicated region
        $region21: #{tpu_custom_call.1} parent=11 // pred_check
          %p373 = pneg %p259
        $region22: #{tpu_custom_call.1} parent=11 // pred_check_branch
          %375 = sbr.rel (%p373) target = $region24
        $region23: #{tpu_custom_call.1} parent=11 // pred_region
          _
        $region24: #{tpu_custom_call.1} parent=11 // pred_fallthru
          _
        // Predicated region
        $region25: #{tpu_custom_call.1} parent=11 // pred_check
          %p376 = pneg %p280
        $region26: #{tpu_custom_call.1} parent=11 // pred_check_branch
          %378 = sbr.rel (%p376) target = $region28
        $region27: #{tpu_custom_call.1} parent=11 // pred_region
          _
        $region28: #{tpu_custom_call.1} parent=11 // pred_fallthru
          _
      $region12: #{tpu_custom_call.1} parent=5 // pred_fallthru
        _
      %p379 = scmp.lt.s32.totalorder %s32, 2
      // Predicated region
      $region29: #{tpu_custom_call.1} parent=5 // pred_check
        %p380 = pneg %p379
      $region30: #{tpu_custom_call.1} parent=5 // pred_check_branch
        %382 = sbr.rel (%p380) target = $region32
      $region31: #{tpu_custom_call.1} parent=5 // pred_region
        // Predicated region
        $region33: #{tpu_custom_call.1} parent=31 // pred_check
          %p383 = pneg %p73
        $region34: #{tpu_custom_call.1} parent=31 // pred_check_branch
          %385 = sbr.rel (%p383) target = $region36
        $region35: #{tpu_custom_call.1} parent=31 // pred_region
          %s386 = sand.u32 %s63, 1
          %s387 = scalar_lea.sflag [#allocation4], %s386
          %s388 = sand.u32 %s63, 1
          %s389 = smul.addr %s388, 8
          %s390 = scalar_lea.vmem [#allocation3], %s389
          %392 = vsyncadd %s387, 0
          %s393 = sadd.s32 %s40, %s39
          %s394 = smul.addr %s393, 8
          %s395 = scalar_lea.hbm %s0, %s394
          %s397 = sshll.u32 %s395, 4
          %s398 = int_to_ptr.hbm [resolvable:$true] %s397
          %s399 = sshll.u32 %s390, 4
          %s400 = int_to_ptr.vmem [resolvable:$true] %s399
          %402 = dma.hbm_to_vmem [thread:$0]  %s398, 128, %s400, %s387
        $region36: #{tpu_custom_call.1} parent=31 // pred_fallthru
          _
        // Predicated region
        $region37: #{tpu_custom_call.1} parent=31 // pred_check
          %p403 = pneg %p103
        $region38: #{tpu_custom_call.1} parent=31 // pred_check_branch
          %405 = sbr.rel (%p403) target = $region40
        $region39: #{tpu_custom_call.1} parent=31 // pred_region
          %s406 = sand.u32 %s32, 1
          %s407 = scalar_lea.sflag [#allocation7], %s406
          %s408 = sand.u32 %s93, 1
          %s409 = smul.addr %s408, 16
          %s410 = scalar_lea.vmem [#allocation6], %s409
          %412 = vsyncadd %s407, 0
          %s413 = smul.addr %s41, 4
          %s414 = sadd.s32 %s40, %s413
          %s415 = smul.addr %s39, 4
          %s416 = sadd.s32 %s414, %s415
          %s417 = smul.addr %s416, 4
          %s418 = scalar_lea.hbm %s1, %s417
          %s419 = sshll.u32 %s418, 4
          %s420 = int_to_ptr.hbm [resolvable:$true] %s419
          %s421 = sshll.u32 %s410, 4
          %s422 = int_to_ptr.vmem [resolvable:$true] %s421
          %427 = dma.hbm_to_vmem [thread:$0]  %s420, 256, %s422, %s407, 64, 64, 4
        $region40: #{tpu_custom_call.1} parent=31 // pred_fallthru
          _
        // Predicated region
        $region41: #{tpu_custom_call.1} parent=31 // pred_check
          %p428 = pneg %p131
        $region42: #{tpu_custom_call.1} parent=31 // pred_check_branch
          %430 = sbr.rel (%p428) target = $region44
        $region43: #{tpu_custom_call.1} parent=31 // pred_region
          %s431 = sand.u32 %s32, 1
          %s432 = scalar_lea.sflag [#allocation7], %s431
          %s433 = sand.u32 %s121, 1
          %s434 = smul.addr %s433, 16
          %s435 = scalar_lea.vmem [#allocation8], %s434
          %437 = vsyncadd %s432, 0
          %s438 = smul.addr %s41, 4
          %s439 = smul.addr %s39, 4
          %s440 = sadd.s32 %s438, %s439
          %s441 = smul.addr %s440, 4
          %s442 = scalar_lea.hbm %s2, %s441
          %s443 = sshll.u32 %s442, 4
          %s444 = int_to_ptr.hbm [resolvable:$true] %s443
          %s445 = sshll.u32 %s435, 4
          %s446 = int_to_ptr.vmem [resolvable:$true] %s445
          %451 = dma.hbm_to_vmem [thread:$0]  %s444, 256, %s446, %s432, 64, 64, 4
        $region44: #{tpu_custom_call.1} parent=31 // pred_fallthru
          _
        // Predicated region
        $region45: #{tpu_custom_call.1} parent=31 // pred_check
          %p452 = pneg %p159
        $region46: #{tpu_custom_call.1} parent=31 // pred_check_branch
          %454 = sbr.rel (%p452) target = $region48
        $region47: #{tpu_custom_call.1} parent=31 // pred_region
          %s455 = sand.u32 %s32, 1
          %s456 = scalar_lea.sflag [#allocation10], %s455
          %s457 = sand.u32 %s149, 1
          %s458 = smul.addr %s457, 16
          %s459 = scalar_lea.vmem [#allocation9], %s458
          %461 = vsyncadd %s456, 0
          %s462 = smul.addr %s41, 4
          %s463 = smul.addr %s39, 4
          %s464 = sadd.s32 %s462, %s463
          %s465 = smul.addr %s464, 4
          %s466 = scalar_lea.hbm %s3, %s465
          %s467 = sshll.u32 %s466, 4
          %s468 = int_to_ptr.hbm [resolvable:$true] %s467
          %s469 = sshll.u32 %s459, 4
          %s470 = int_to_ptr.vmem [resolvable:$true] %s469
          %475 = dma.hbm_to_vmem [thread:$0]  %s468, 256, %s470, %s456, 64, 64, 4
        $region48: #{tpu_custom_call.1} parent=31 // pred_fallthru
          _
        // Predicated region
        $region49: #{tpu_custom_call.1} parent=31 // pred_check
          %p476 = pneg %p185
        $region50: #{tpu_custom_call.1} parent=31 // pred_check_branch
          %478 = sbr.rel (%p476) target = $region52
        $region51: #{tpu_custom_call.1} parent=31 // pred_region
          %p479 = scmp.lt.s32.totalorder %s39, 1
          %s480 = scalar_select %p479, %s39, 1
          %s481 = scalar_lea.vmem %s4, %s480
        $region52: #{tpu_custom_call.1} parent=31 // pred_fallthru
          _
      $region32: #{tpu_custom_call.1} parent=5 // pred_fallthru
        _
      %p482 = scmp.le.s32.totalorder 1, %s32
      %p483 = scmp.lt.s32.totalorder %s32, 3
      %p484 = pnand %p482, %p483
      %p485 = pneg %p484
      // Predicated region
      $region53: #{tpu_custom_call.1} parent=5 // pred_check
        _
      $region54: #{tpu_custom_call.1} parent=5 // pred_check_branch
        %487 = sbr.rel (%p484) target = $region56
      $region55: #{tpu_custom_call.1} parent=5 // pred_region
        %s488 = ssub.s32 %s32, 1
        %s489 = sand.u32 %s66, 1
        %s490 = scalar_lea.sflag [#allocation4], %s489
        %s491 = sand.u32 %s66, 1
        %s492 = smul.addr %s491, 8
        %s493 = scalar_lea.vmem [#allocation3], %s492
        // Predicated region
        $region57: #{tpu_custom_call.1} parent=55 // pred_check
          %p494 = pneg %p79
        $region58: #{tpu_custom_call.1} parent=55 // pred_check_branch
          %496 = sbr.rel (%p494) target = $region60
        $region59: #{tpu_custom_call.1} parent=55 // pred_region
          %498 = dma.done %s490, 128
        $region60: #{tpu_custom_call.1} parent=55 // pred_fallthru
          _
        %s499 = sand.u32 %s37, 1
        %s500 = scalar_lea.sflag [#allocation7], %s499
        %s501 = sand.u32 %s96, 1
        %s502 = smul.addr %s501, 16
        %s503 = scalar_lea.vmem [#allocation6], %s502
        // Predicated region
        $region61: #{tpu_custom_call.1} parent=55 // pred_check
          %p504 = pneg %p109
        $region62: #{tpu_custom_call.1} parent=55 // pred_check_branch
          %506 = sbr.rel (%p504) target = $region64
        $region63: #{tpu_custom_call.1} parent=55 // pred_region
          %508 = dma.done %s500, 256
        $region64: #{tpu_custom_call.1} parent=55 // pred_fallthru
          _
        %s509 = sand.u32 %s37, 1
        %s510 = scalar_lea.sflag [#allocation7], %s509
        %s511 = sand.u32 %s124, 1
        %s512 = smul.addr %s511, 16
        %s513 = scalar_lea.vmem [#allocation8], %s512
        // Predicated region
        $region65: #{tpu_custom_call.1} parent=55 // pred_check
          %p514 = pneg %p137
        $region66: #{tpu_custom_call.1} parent=55 // pred_check_branch
          %516 = sbr.rel (%p514) target = $region68
        $region67: #{tpu_custom_call.1} parent=55 // pred_region
          %518 = dma.done %s510, 256
        $region68: #{tpu_custom_call.1} parent=55 // pred_fallthru
          _
        %s519 = sand.u32 %s37, 1
        %s520 = scalar_lea.sflag [#allocation10], %s519
        %s521 = sand.u32 %s152, 1
        %s522 = smul.addr %s521, 16
        %s523 = scalar_lea.vmem [#allocation9], %s522
        // Predicated region
        $region69: #{tpu_custom_call.1} parent=55 // pred_check
          %p524 = pneg %p165
        $region70: #{tpu_custom_call.1} parent=55 // pred_check_branch
          %526 = sbr.rel (%p524) target = $region72
        $region71: #{tpu_custom_call.1} parent=55 // pred_region
          %528 = dma.done %s520, 256
        $region72: #{tpu_custom_call.1} parent=55 // pred_fallthru
          _
        // Predicated region
        $region73: #{tpu_custom_call.1} parent=55 // pred_check
          %p529 = pneg %p217
        $region74: #{tpu_custom_call.1} parent=55 // pred_check_branch
          %531 = sbr.rel (%p529) target = $region76
        $region75: #{tpu_custom_call.1} parent=55 // pred_region
          %533 = dma.done [#allocation10], 256
        $region76: #{tpu_custom_call.1} parent=55 // pred_fallthru
          _
        %s534 = sand.u32 %s66, 1
        %s535 = scalar_lea.sflag [#allocation4], %s534
        %s536 = sand.u32 %s66, 1
        %s537 = smul.addr %s536, 8
        %s538 = scalar_lea.vmem [#allocation3], %s537
        %p539 = pneg %p79
        %p540 = pneg %p76
        %s541 = sand.u32 %s37, 1
        %s542 = scalar_lea.sflag [#allocation7], %s541
        %s543 = sand.u32 %s96, 1
        %s544 = smul.addr %s543, 16
        %s545 = scalar_lea.vmem [#allocation6], %s544
        %p546 = pneg %p109
        %p547 = pneg %p106
        %s548 = sand.u32 %s37, 1
        %s549 = scalar_lea.sflag [#allocation7], %s548
        %s550 = sand.u32 %s124, 1
        %s551 = smul.addr %s550, 16
        %s552 = scalar_lea.vmem [#allocation8], %s551
        %p553 = pneg %p137
        %p554 = pneg %p134
        %s555 = sand.u32 %s37, 1
        %s556 = scalar_lea.sflag [#allocation10], %s555
        %s557 = sand.u32 %s152, 1
        %s558 = smul.addr %s557, 16
        %s559 = scalar_lea.vmem [#allocation9], %s558
        %p560 = pneg %p165
        %p561 = pneg %p162
        %p562 = scmp.lt.s32.totalorder %s42, 1
        %s563 = scalar_select %p562, %s42, 1
        %s564 = scalar_lea.vmem %s4, %s563
        %p565 = pneg %p191
        %p566 = pneg %p188
        %p567 = pneg %p217
        %p568 = pneg %p214
        %p569 = pneg %p238
        %p570 = pneg %p235
        %p571 = pneg %p259
        %p572 = pneg %p256
        %p573 = pneg %p280
        %p574 = pneg %p277
        %p575 = pneg %p308
        %p576 = pneg %p305
        %s577 = sand.u32 %s295, 1
        %s578 = scalar_lea.sflag [#allocation5], %s577
        %s579 = sand.u32 %s295, 1
        %s580 = smul.addr %s579, 8
        %s581 = scalar_lea.vmem [#allocation12], %s580
        %p582 = pneg %p338
        %p583 = pneg %p335
        %s584 = sand.u32 %s325, 1
        %s585 = scalar_lea.sflag [#allocation14], %s584
        %s586 = sand.u32 %s325, 1
        %s587 = smul.addr %s586, 16
        %s588 = scalar_lea.vmem [#allocation13], %s587
        %p589 = scmp.lt.s32.totalorder %s42, 1
        %s590 = scalar_select %p589, %s42, 1
        %s591 = scalar_lea.vmem %s4, %s590
        %s592 = smul.u32 4, %s44
        %v594 = vld [vmem:[%s503] sm:$0xf]
        %v595 = vld [vmem:[%s503 + $0x4] sm:$0xf]
        %v596 = vld [vmem:[%s503 + $0x8] sm:$0xf]
        %v597 = vld [vmem:[%s503 + $0xc] sm:$0xf]
        %v598 = vld [vmem:[%s513] sm:$0xf]
        %v599 = vld [vmem:[%s513 + $0x4] sm:$0xf]
        %v600 = vld [vmem:[%s513 + $0x8] sm:$0xf]
        %v601 = vld [vmem:[%s513 + $0xc] sm:$0xf]
        %v602 = vld [vmem:[%s523] sm:$0xf]
        %v603 = vld [vmem:[%s523 + $0x4] sm:$0xf]
        %v604 = vld [vmem:[%s523 + $0x8] sm:$0xf]
        %v605 = vld [vmem:[%s523 + $0xc] sm:$0xf]
        %v606 = vld [vmem:[%s591] sm:$0x1]
        %v608 = vperm.slane %v606, 0
        %vm610 = vcmask 64512
        %v612 = vsel %vm610, %v594, 0
        %v615 = vsel %vm610, %v598, 0
        %617 = vmatpush.bf16.xpose.msra.mxu0 0
        %618 = vmatpush.bf16.xpose.msra.mxu0 0
        %619 = vmatpush.bf16.xpose.msra.mxu0 0
        %620 = vmatpush.bf16.xpose.msra.mxu0 0
        %621 = vmatpush.bf16.xpose.msra.mxu0 0
        %622 = vmatpush.bf16.xpose.msra.mxu0 0
        %623 = vmatpush.bf16.xpose.msra.mxu0 0
        %624 = vmatpush.bf16.xpose.msra.mxu0 %v615
        %625 = vmatmul.bf16.gmra.mxu0 %v612
        %v626 = vpop.f32.mrf.mxu0
        %v627 = vadd.f32 %v608, %v626
        %v628 = vpop.f32.mrf.mxu0
        %629 = vdwg.mxu0
        %v631 = vsel %vm610, %v595, 0
        %v634 = vsel %vm610, %v599, 0
        %636 = vmatpush.bf16.xpose.msra.mxu0 0
        %637 = vmatpush.bf16.xpose.msra.mxu0 0
        %638 = vmatpush.bf16.xpose.msra.mxu0 0
        %639 = vmatpush.bf16.xpose.msra.mxu0 0
        %640 = vmatpush.bf16.xpose.msra.mxu0 0
        %641 = vmatpush.bf16.xpose.msra.mxu0 0
        %642 = vmatpush.bf16.xpose.msra.mxu0 0
        %643 = vmatpush.bf16.xpose.msra.mxu0 %v634
        %644 = vmatmul.bf16.gmra.mxu0 %v631
        %v645 = vpop.f32.mrf.mxu0
        %v646 = vadd.f32 %v608, %v645
        %v647 = vpop.f32.mrf.mxu0
        %648 = vdwg.mxu0
        %v650 = vsel %vm610, %v596, 0
        %v653 = vsel %vm610, %v600, 0
        %655 = vmatpush.bf16.xpose.msra.mxu0 0
        %656 = vmatpush.bf16.xpose.msra.mxu0 0
        %657 = vmatpush.bf16.xpose.msra.mxu0 0
        %658 = vmatpush.bf16.xpose.msra.mxu0 0
        %659 = vmatpush.bf16.xpose.msra.mxu0 0
        %660 = vmatpush.bf16.xpose.msra.mxu0 0
        %661 = vmatpush.bf16.xpose.msra.mxu0 0
        %662 = vmatpush.bf16.xpose.msra.mxu0 %v653
        %663 = vmatmul.bf16.gmra.mxu0 %v650
        %v664 = vpop.f32.mrf.mxu0
        %v665 = vadd.f32 %v608, %v664
        %v666 = vpop.f32.mrf.mxu0
        %667 = vdwg.mxu0
        %v669 = vsel %vm610, %v597, 0
        %v672 = vsel %vm610, %v601, 0
        %674 = vmatpush.bf16.xpose.msra.mxu0 0
        %675 = vmatpush.bf16.xpose.msra.mxu0 0
        %676 = vmatpush.bf16.xpose.msra.mxu0 0
        %677 = vmatpush.bf16.xpose.msra.mxu0 0
        %678 = vmatpush.bf16.xpose.msra.mxu0 0
        %679 = vmatpush.bf16.xpose.msra.mxu0 0
        %680 = vmatpush.bf16.xpose.msra.mxu0 0
        %681 = vmatpush.bf16.xpose.msra.mxu0 %v672
        %682 = vmatmul.bf16.gmra.mxu0 %v669
        %v683 = vpop.f32.mrf.mxu0
        %v684 = vadd.f32 %v608, %v683
        %v685 = vpop.f32.mrf.mxu0
        %686 = vdwg.mxu0
        %v687 = vsel %vm610, %v627, -inf
        %688 = vmax.xlane.f32.xlu0 %v687
        %v689 = vpop.xlane.xlu0 %688
        %v690 = vsel %vm610, %v646, -inf
        %691 = vmax.xlane.f32.xlu0 %v690
        %v692 = vpop.xlane.xlu0 %691
        %v693 = vsel %vm610, %v665, -inf
        %694 = vmax.xlane.f32.xlu0 %v693
        %v695 = vpop.xlane.xlu0 %694
        %v696 = vsel %vm610, %v684, -inf
        %697 = vmax.xlane.f32.xlu0 %v696
        %v698 = vpop.xlane.xlu0 %697
        %v699 = vsub.f32 %v627, %v689
        %v700 = vsub.f32 %v646, %v692
        %v701 = vsub.f32 %v665, %v695
        %v702 = vsub.f32 %v684, %v698
        %v703 = vmul.f32 %v699, 1.442695
        %v704 = vpow.pop %v703
        %v705 = vmul.f32 %v700, 1.442695
        %v706 = vpow.pop %v705
        %v707 = vmul.f32 %v701, 1.442695
        %v708 = vpow.pop %v707
        %v709 = vmul.f32 %v702, 1.442695
        %v710 = vpow.pop %v709
        %v711 = vsel %vm610, %v704, 0.0
        %712 = vadd.xlane.f32.xlu0 %v711
        %v713 = vpop.xlane.xlu0 %712
        %v714 = vsel %vm610, %v706, 0.0
        %715 = vadd.xlane.f32.xlu0 %v714
        %v716 = vpop.xlane.xlu0 %715
        %v717 = vsel %vm610, %v708, 0.0
        %718 = vadd.xlane.f32.xlu0 %v717
        %v719 = vpop.xlane.xlu0 %718
        %v720 = vsel %vm610, %v710, 0.0
        %721 = vadd.xlane.f32.xlu0 %v720
        %v722 = vpop.xlane.xlu0 %721
        %v723 = vrcp.pop %v713
        %v724 = vrcp.pop %v716
        %v725 = vrcp.pop %v719
        %v726 = vrcp.pop %v722
        %v727 = vmul.f32 %v704, %v723
        %v728 = vmul.f32 %v706, %v724
        %v729 = vmul.f32 %v708, %v725
        %v730 = vmul.f32 %v710, %v726
        %v731 = vpack.c.bf16 %v727, %v727
        %v732 = vpack.c.bf16 %v728, %v728
        %v733 = vpack.c.bf16 %v729, %v729
        %v734 = vpack.c.bf16 %v730, %v730
        %vm735 = vcmask 60416
        %736 = vst.msk [vmem:[%s588] sm:$0xf] %vm735, %v731
        %737 = vst.msk [vmem:[%s588 + $0x4] sm:$0xf] %vm735, %v732
        %738 = vst.msk [vmem:[%s588 + $0x8] sm:$0xf] %vm735, %v733
        %739 = vst.msk [vmem:[%s588 + $0xc] sm:$0xf] %vm735, %v734
        %v741 = vsel %vm610, %v731, 0
        %vm743 = vcmask 1043456
        %v745 = vsel %vm743, %v602, 0
        %747 = vmatpush.bf16.msra.mxu0 0
        %748 = vmatpush.bf16.msra.mxu0 0
        %749 = vmatpush.bf16.msra.mxu0 0
        %750 = vmatpush.bf16.msra.mxu0 0
        %751 = vmatpush.bf16.msra.mxu0 0
        %752 = vmatpush.bf16.msra.mxu0 0
        %753 = vmatpush.bf16.msra.mxu0 0
        %754 = vmatpush.bf16.msra.mxu0 %v745
        %755 = vmatmul.bf16.gmra.mxu0 %v741
        %v756 = vpop.f32.mrf.mxu0
        %v757 = vadd.f32 0.0, %v756
        %v758 = vpop.f32.mrf.mxu0
        %759 = vdwg.mxu0
        %v761 = vsel %vm610, %v732, 0
        %v764 = vsel %vm743, %v603, 0
        %766 = vmatpush.bf16.msra.mxu0 0
        %767 = vmatpush.bf16.msra.mxu0 0
        %768 = vmatpush.bf16.msra.mxu0 0
        %769 = vmatpush.bf16.msra.mxu0 0
        %770 = vmatpush.bf16.msra.mxu0 0
        %771 = vmatpush.bf16.msra.mxu0 0
        %772 = vmatpush.bf16.msra.mxu0 0
        %773 = vmatpush.bf16.msra.mxu0 %v764
        %774 = vmatmul.bf16.gmra.mxu0 %v761
        %v775 = vpop.f32.mrf.mxu0
        %v776 = vadd.f32 0.0, %v775
        %v777 = vpop.f32.mrf.mxu0
        %778 = vdwg.mxu0
        %v780 = vsel %vm610, %v733, 0
        %v783 = vsel %vm743, %v604, 0
        %785 = vmatpush.bf16.msra.mxu0 0
        %786 = vmatpush.bf16.msra.mxu0 0
        %787 = vmatpush.bf16.msra.mxu0 0
        %788 = vmatpush.bf16.msra.mxu0 0
        %789 = vmatpush.bf16.msra.mxu0 0
        %790 = vmatpush.bf16.msra.mxu0 0
        %791 = vmatpush.bf16.msra.mxu0 0
        %792 = vmatpush.bf16.msra.mxu0 %v783
        %793 = vmatmul.bf16.gmra.mxu0 %v780
        %v794 = vpop.f32.mrf.mxu0
        %v795 = vadd.f32 0.0, %v794
        %v796 = vpop.f32.mrf.mxu0
        %797 = vdwg.mxu0
        %v799 = vsel %vm610, %v734, 0
        %v802 = vsel %vm743, %v605, 0
        %804 = vmatpush.bf16.msra.mxu0 0
        %805 = vmatpush.bf16.msra.mxu0 0
        %806 = vmatpush.bf16.msra.mxu0 0
        %807 = vmatpush.bf16.msra.mxu0 0
        %808 = vmatpush.bf16.msra.mxu0 0
        %809 = vmatpush.bf16.msra.mxu0 0
        %810 = vmatpush.bf16.msra.mxu0 0
        %811 = vmatpush.bf16.msra.mxu0 %v802
        %812 = vmatmul.bf16.gmra.mxu0 %v799
        %v813 = vpop.f32.mrf.mxu0
        %v814 = vadd.f32 0.0, %v813
        %v815 = vpop.f32.mrf.mxu0
        %816 = vdwg.mxu0
        %v817 = vpack.c.bf16 %v757, %v757
        %v818 = vld [vmem:[#allocation11] sm:$0xf]
        %v819 = vpack.c.bf16 %v776, %v776
        %s820 = scalar_lea.vmem [#allocation11], 4
        %v821 = vld [vmem:[%s820] sm:$0xf]
        %v823 = vsel %vm610, %v819, 0
        %v826 = vsel %vm743, %v821, 0
        %828 = vmatpush.bf16.msra.mxu0 0
        %829 = vmatpush.bf16.msra.mxu0 0
        %830 = vmatpush.bf16.msra.mxu0 0
        %831 = vmatpush.bf16.msra.mxu0 0
        %832 = vmatpush.bf16.msra.mxu0 0
        %833 = vmatpush.bf16.msra.mxu0 0
        %834 = vmatpush.bf16.msra.mxu0 0
        %835 = vmatpush.bf16.msra.mxu0 %v826
        %836 = vmatmul.bf16.gmra.mxu0 %v823
        %v837 = vpop.f32.mrf.mxu0
        %v838 = vadd.f32 0.0, %v837
        %v839 = vpop.f32.mrf.mxu0
        %840 = vdwg.mxu0
        %v842 = vsel %vm610, %v817, 0
        %v845 = vsel %vm743, %v818, 0
        %847 = vmatpush.bf16.msra.mxu0 0
        %848 = vmatpush.bf16.msra.mxu0 0
        %849 = vmatpush.bf16.msra.mxu0 0
        %850 = vmatpush.bf16.msra.mxu0 0
        %851 = vmatpush.bf16.msra.mxu0 0
        %852 = vmatpush.bf16.msra.mxu0 0
        %853 = vmatpush.bf16.msra.mxu0 0
        %854 = vmatpush.bf16.msra.mxu0 %v845
        %855 = vmatmul.bf16.gmra.mxu0 %v842
        %v856 = vpop.f32.mrf.mxu0
        %v857 = vadd.f32 %v838, %v856
        %v858 = vpop.f32.mrf.mxu0
        %859 = vdwg.mxu0
        %v860 = vpack.c.bf16 %v795, %v795
        %s861 = scalar_lea.vmem [#allocation11], 8
        %v862 = vld [vmem:[%s861] sm:$0xf]
        %v864 = vsel %vm610, %v860, 0
        %v867 = vsel %vm743, %v862, 0
        %869 = vmatpush.bf16.msra.mxu0 0
        %870 = vmatpush.bf16.msra.mxu0 0
        %871 = vmatpush.bf16.msra.mxu0 0
        %872 = vmatpush.bf16.msra.mxu0 0
        %873 = vmatpush.bf16.msra.mxu0 0
        %874 = vmatpush.bf16.msra.mxu0 0
        %875 = vmatpush.bf16.msra.mxu0 0
        %876 = vmatpush.bf16.msra.mxu0 %v867
        %877 = vmatmul.bf16.gmra.mxu0 %v864
        %v878 = vpop.f32.mrf.mxu0
        %v879 = vadd.f32 0.0, %v878
        %v880 = vpop.f32.mrf.mxu0
        %881 = vdwg.mxu0
        %v882 = vadd.f32 %v857, %v879
        %v883 = vpack.c.bf16 %v814, %v814
        %s884 = scalar_lea.vmem [#allocation11], 12
        %v885 = vld [vmem:[%s884] sm:$0xf]
        %v887 = vsel %vm610, %v883, 0
        %v890 = vsel %vm743, %v885, 0
        %892 = vmatpush.bf16.msra.mxu0 0
        %893 = vmatpush.bf16.msra.mxu0 0
        %894 = vmatpush.bf16.msra.mxu0 0
        %895 = vmatpush.bf16.msra.mxu0 0
        %896 = vmatpush.bf16.msra.mxu0 0
        %897 = vmatpush.bf16.msra.mxu0 0
        %898 = vmatpush.bf16.msra.mxu0 0
        %899 = vmatpush.bf16.msra.mxu0 %v890
        %900 = vmatmul.bf16.gmra.mxu0 %v887
        %v901 = vpop.f32.mrf.mxu0
        %v902 = vadd.f32 0.0, %v901
        %v903 = vpop.f32.mrf.mxu0
        %904 = vdwg.mxu0
        %v905 = vadd.f32 %v882, %v902
        %p906 = scmp.eq.s32.totalorder %s44, 0
        // Predicated region
        $region77: #{tpu_custom_call.1} parent=55 // pred_check
          %p907 = pneg %p906
        $region78: #{tpu_custom_call.1} parent=55 // pred_check_branch
          %909 = sbr.rel (%p907) target = $region80
        $region79: #{tpu_custom_call.1} parent=55 // pred_region
          %vm910 = vcmask 261120
          %911 = vst.msk [vmem:[#allocation2] sm:$0xff] %vm910, %v905
        $region80: #{tpu_custom_call.1} parent=55 // pred_fallthru
          _
        %p912 = scmp.ne.s32.totalorder %s44, 0
        // Predicated region
        $region81: #{tpu_custom_call.1} parent=55 // pred_check
          %p913 = pneg %p912
        $region82: #{tpu_custom_call.1} parent=55 // pred_check_branch
          %915 = sbr.rel (%p913) target = $region84
        $region83: #{tpu_custom_call.1} parent=55 // pred_region
          %v916 = vld [vmem:[#allocation2] sm:$0xff]
          %v917 = vadd.f32 %v916, %v905
          %vm918 = vcmask 261120
          %919 = vst.msk [vmem:[#allocation2] sm:$0xff] %vm918, %v917
        $region84: #{tpu_custom_call.1} parent=55 // pred_fallthru
          _
        // Predicated region
        $region85: #{tpu_custom_call.1} parent=55 // pred_check
          %p920 = pneg %p906
        $region86: #{tpu_custom_call.1} parent=55 // pred_check_branch
          %922 = sbr.rel (%p920) target = $region88
        $region87: #{tpu_custom_call.1} parent=55 // pred_region
          %v923 = vld [vmem:[#allocation2] sm:$0xff]
          %v924 = vld [vmem:[%s6] sm:$0x1]
          %v926 = vperm.slane %v924, 0
          %v928 = vadd.f32 %v923, %v926
          %v929 = vld [vmem:[%s493] sm:$0xff]
          %v930 = vadd.f32 %v928, %v929
          %vm931 = vcmask 261120
          %v932 = vsel %vm931, %v930, 0.0
          %933 = vadd.xlane.f32.xlu0 %v932
          %v934 = vpop.xlane.xlu0 %933
          %v935 = vrcp.pop 32.0
          %v936 = vmul.f32 32.0, %v935
          %v937 = vsub.f32 1.0, %v936
          %v938 = vmul.f32 %v935, %v937
          %v939 = vadd.f32 %v935, %v938
          %vm940 = vweird.f32 %v935
          %v941 = vsel %vm940, %v935, %v939
          %v942 = vmul.f32 %v934, %v941
          %v943 = vsub.f32 %v930, %v942
          %v944 = vmul.f32 %v943, %v943
          %v945 = vsel %vm931, %v944, 0.0
          %946 = vadd.xlane.f32.xlu0 %v945
          %v947 = vpop.xlane.xlu0 %946
          %v948 = vmul.f32 %v947, %v941
          %v949 = vld [vmem:[%s7] sm:$0x1]
          %v950 = vadd.f32 %v948, 1e-12
          %v951 = vrsqrt.pop %v950
          %v952 = vmul.f32 %v951, %v950
          %v953 = vmul.f32 %v952, %v951
          %v954 = vmul.f32 0.5, %v953
          %v955 = vsub.f32 1.5, %v954
          %v956 = vmul.f32 %v951, %v955
          %vm957 = vweird.f32 %v950
          %vm958 = vweird.f32 %v951
          %vm959 = vmor %vm957, %vm958
          %v960 = vsel %vm959, %v951, %v956
          %v961 = vmul.f32 %v943, %v960
          %v963 = vperm.slane %v949, 0
          %v965 = vmul.f32 %v963, %v961
          %v966 = vld [vmem:[%s8] sm:$0x1]
          %v968 = vperm.slane %v966, 0
          %v970 = vadd.f32 %v965, %v968
          %971 = vst.msk [vmem:[%s581] sm:$0xff] %vm931, %v970
        $region88: #{tpu_custom_call.1} parent=55 // pred_fallthru
          _
        %s972 = sand.u32 %s295, 1
        %s973 = scalar_lea.sflag [#allocation5], %s972
        %s974 = sand.u32 %s295, 1
        %s975 = smul.addr %s974, 8
        %s976 = scalar_lea.vmem [#allocation12], %s975
        %s977 = sand.u32 %s325, 1
        %s978 = scalar_lea.sflag [#allocation14], %s977
        %s979 = sand.u32 %s325, 1
        %s980 = smul.addr %s979, 16
        %s981 = scalar_lea.vmem [#allocation13], %s980
        // Predicated region
        $region89: #{tpu_custom_call.1} parent=55 // pred_check
          %p982 = pneg %p305
        $region90: #{tpu_custom_call.1} parent=55 // pred_check_branch
          %984 = sbr.rel (%p982) target = $region92
        $region91: #{tpu_custom_call.1} parent=55 // pred_region
          %986 = vsyncadd %s973, 0
          %s987 = sadd.s32 %s43, %s42
          %s988 = smul.addr %s987, 8
          %s989 = scalar_lea.hbm %s9, %s988
          %s991 = sshll.u32 %s976, 4
          %s992 = int_to_ptr.vmem [resolvable:$true] %s991
          %s993 = sshll.u32 %s989, 4
          %s994 = int_to_ptr.hbm [resolvable:$true] %s993
          %996 = dma.vmem_to_hbm [thread:$0]  %s992, 128, %s994, %s973
        $region92: #{tpu_custom_call.1} parent=55 // pred_fallthru
          _
        // Predicated region
        $region93: #{tpu_custom_call.1} parent=55 // pred_check
          %p997 = pneg %p335
        $region94: #{tpu_custom_call.1} parent=55 // pred_check_branch
          %999 = sbr.rel (%p997) target = $region96
        $region95: #{tpu_custom_call.1} parent=55 // pred_region
          %s1000 = smul.u32 4, %s44
          %1002 = vsyncadd %s978, 0
          %s1003 = sadd.s32 %s43, %s1000
          %s1004 = smul.addr %s42, 4
          %s1005 = sadd.s32 %s1003, %s1004
          %s1006 = smul.addr %s1005, 4
          %s1007 = scalar_lea.hbm %s10, %s1006
          %s1008 = sshll.u32 %s981, 4
          %s1009 = int_to_ptr.vmem [resolvable:$true] %s1008
          %s1010 = sshll.u32 %s1007, 4
          %s1011 = int_to_ptr.hbm [resolvable:$true] %s1010
          %1016 = dma.vmem_to_hbm [thread:$0]  %s1009, 256, %s1011, %s978, 64, 64, 4
        $region96: #{tpu_custom_call.1} parent=55 // pred_fallthru
          _
      $region56: #{tpu_custom_call.1} parent=5 // pred_fallthru
        _
      %p1017 = scmp.le.s32.totalorder 2, %s32
      // Predicated region
      $region97: #{tpu_custom_call.1} parent=5 // pred_check
        %p1018 = pneg %p1017
      $region98: #{tpu_custom_call.1} parent=5 // pred_check_branch
        %1020 = sbr.rel (%p1018) target = $region100
      $region99: #{tpu_custom_call.1} parent=5 // pred_region
        %s1021 = ssub.s32 %s32, 2
        // Predicated region
        $region101: #{tpu_custom_call.1} parent=99 // pred_check
          %p1022 = pneg %p311
        $region102: #{tpu_custom_call.1} parent=99 // pred_check_branch
          %1024 = sbr.rel (%p1022) target = $region104
        $region103: #{tpu_custom_call.1} parent=99 // pred_region
          %s1025 = sand.u32 %s296, 1
          %s1026 = scalar_lea.sflag [#allocation5], %s1025
          %s1027 = sand.u32 %s296, 1
          %s1028 = smul.addr %s1027, 8
          %s1029 = scalar_lea.vmem [#allocation12], %s1028
          %1031 = dma.done %s1026, 128
        $region104: #{tpu_custom_call.1} parent=99 // pred_fallthru
          _
        // Predicated region
        $region105: #{tpu_custom_call.1} parent=99 // pred_check
          %p1032 = pneg %p341
        $region106: #{tpu_custom_call.1} parent=99 // pred_check_branch
          %1034 = sbr.rel (%p1032) target = $region108
        $region107: #{tpu_custom_call.1} parent=99 // pred_region
          %s1035 = sand.u32 %s326, 1
          %s1036 = scalar_lea.sflag [#allocation14], %s1035
          %s1037 = sand.u32 %s326, 1
          %s1038 = smul.addr %s1037, 16
          %s1039 = scalar_lea.vmem [#allocation13], %s1038
          %1041 = dma.done %s1036, 256
        $region108: #{tpu_custom_call.1} parent=99 // pred_fallthru
          _
      $region100: #{tpu_custom_call.1} parent=5 // pred_fallthru
        _
    $region6: #{tpu_custom_call.1} parent=1 // loop_footer
      %s36 = sadd.s32 1, %s32
    $region7: #{tpu_custom_call.1} parent=1 // loop_footer_branch
      %31 = sbr.rel target = $region3
    $region8: #{tpu_custom_call.1} parent=1 // loop_exit
      _
    %1042 = vsyncpa [#allocation4], 1
    %s1043 = scalar_lea.sflag [#allocation4], 1
    %1044 = vsyncpa %s1043, 1
    %1045 = vsyncpa [#allocation7], 1
    %s1046 = scalar_lea.sflag [#allocation7], 1
    %1047 = vsyncpa %s1046, 1
    %1048 = vsyncpa [#allocation10], 1
    %s1049 = scalar_lea.sflag [#allocation10], 1
    %1050 = vsyncpa %s1049, 1
    %1051 = vsyncpa [#allocation5], 1
    %s1052 = scalar_lea.sflag [#allocation5], 1
    %1053 = vsyncpa %s1052, 1
    %1054 = vsyncpa [#allocation14], 1
    %s1055 = scalar_lea.sflag [#allocation14], 1
    %1056 = vsyncpa %s1055, 1

</llo_original>
